<compile_context>
chip_gen: v5e
topology: v5e:2x2
jax: 0.10.0
libtpu: 0.0.40
codegen_flags: <defaults>
</compile_context>

<pallas_src>
import jax
import jax.numpy as jnp
from jax.experimental import pallas as pl
from jax.experimental.pallas import tpu as pltpu

HIDDEN_PAD = 128   # hidden dim 32 padded to full lane width
HEAD_PAD = 128     # each head half (out_dim) padded to full lane width


def _pad8(n: int) -> int:
    return ((n + 7) // 8) * 8


def actor_kernel(state_ref, params_ref, eps_ref, out_ref):
    H = HIDDEN_PAD
    P = HEAD_PAD
    in_dim = state_ref.shape[1]
    in_pad = _pad8(in_dim)

    # Static, 8-row / 128-lane aligned views into the single parameter slab.
    r_b1 = in_pad
    r_wh = in_pad + 8
    r_bh = r_wh + H
    w1 = params_ref[0:in_dim, 0:H]            # (in_dim, 128)
    b1 = params_ref[r_b1:r_b1 + 1, 0:H]       # (1, 128)
    wh = params_ref[r_wh:r_wh + H, :]         # (128, 256) = [Wmu_pad | Wls_pad]
    bh = params_ref[r_bh:r_bh + 1, :]         # (1, 256)

    # hidden1 + ReLU (full 128-lane vregs; padded lanes stay exactly 0).
    h = jnp.dot(state_ref[...], w1, preferred_element_type=jnp.float32)
    x = jnp.maximum(h + b1, 0.0)

    # Fused heads: one matmul producing [mu_pre | log_std_pre], 128-aligned halves.
    z = jnp.dot(x, wh, preferred_element_type=jnp.float32) + bh

    mu = jnp.tanh(z[:, 0:P])
    # exp(softplus(z)) == 1 + exp(z) exactly -> one fewer EUP transcendental.
    std = 1.0 + jnp.exp(z[:, P:2 * P])

    # Normal(mu, std).sample() via reparameterization with pre-drawn (padded) eps.
    action = mu + std * eps_ref[...]

    # Three unmasked, 128-lane-aligned stores into the packed output slab.
    out_ref[:, 0:P] = action
    out_ref[:, P:2 * P] = mu
    out_ref[:, 2 * P:3 * P] = std


def actor_forward(state, param_slab, eps):
    """Runs the Actor forward pass in a single Pallas kernel.

    Returns (action, mu, std).  PyTorch returns a Normal `dist` object; we return
    its parameters (mu, std) plus a reparameterized sample instead.
    """
    batch, out_dim = eps.shape

    # Layout plumbing only: present eps as a full 128-lane slab (zeros elsewhere).
    eps_pad = jnp.zeros((batch, HEAD_PAD), jnp.float32).at[:, :out_dim].set(eps)

    vmem = pl.BlockSpec(memory_space=pltpu.MemorySpace.VMEM)
    packed = pl.pallas_call(
        actor_kernel,
        out_shape=jax.ShapeDtypeStruct((batch, 3 * HEAD_PAD), jnp.float32),
        in_specs=[vmem, vmem, vmem],
        out_specs=vmem,
    )(state, param_slab, eps_pad)

    action = packed[:, 0:out_dim]
    mu = packed[:, HEAD_PAD:HEAD_PAD + out_dim]
    std = packed[:, 2 * HEAD_PAD:2 * HEAD_PAD + out_dim]
    return action, mu, std


def init_actor_params(key, in_dim, out_dim, hidden=32, init_w=0.003):
    """Deterministic init mirroring the PyTorch module's shapes.

    hidden1: PyTorch-default uniform fan-in init; mu_layer / log_std_layer:
    uniform(-init_w, init_w) as in `initialize_uniformly`.  Weights are stored
    as (in_features, out_features).
    """
    k1, k2, k3, k4, k5, k6 = jax.random.split(key, 6)
    bound1 = 1.0 / jnp.sqrt(in_dim)
    w1 = jax.random.uniform(k1, (in_dim, hidden), jnp.float32, -bound1, bound1)
    b1 = jax.random.uniform(k2, (1, hidden), jnp.float32, -bound1, bound1)
    wmu = jax.random.uniform(k3, (hidden, out_dim), jnp.float32, -init_w, init_w)
    bmu = jax.random.uniform(k4, (1, out_dim), jnp.float32, -init_w, init_w)
    wls = jax.random.uniform(k5, (hidden, out_dim), jnp.float32, -init_w, init_w)
    bls = jax.random.uniform(k6, (1, out_dim), jnp.float32, -init_w, init_w)
    return (w1, b1, wmu, bmu, wls, bls)


def pack_actor_params(params):
    """One-time packing of ALL parameters into a single lane-dense (rows, 256) slab.

    Every section starts on an 8-row boundary; all padding lanes/rows are exactly 0
    so padded hidden/head positions contribute nothing to the real outputs.
    """
    w1, b1, wmu, bmu, wls, bls = params
    in_dim, hidden = w1.shape
    out_dim = wmu.shape[1]
    in_pad = _pad8(in_dim)

    rows = in_pad + 8 + HIDDEN_PAD + 8
    slab = jnp.zeros((rows, 2 * HEAD_PAD), jnp.float32)

    # W1: rows [0, in_dim), lanes [0, hidden)
    slab = slab.at[:in_dim, :hidden].set(w1)
    # b1: row in_pad, lanes [0, hidden)
    slab = slab.at[in_pad, :hidden].set(b1[0])
    # W_head: rows [in_pad+8, in_pad+8+hidden); mu lanes [0,out_dim), ls lanes [128,128+out_dim)
    r = in_pad + 8
    slab = slab.at[r:r + hidden, :out_dim].set(wmu)
    slab = slab.at[r:r + hidden, HEAD_PAD:HEAD_PAD + out_dim].set(wls)
    # b_head: row in_pad+8+128
    rb = r + HIDDEN_PAD
    slab = slab.at[rb, :out_dim].set(bmu[0])
    slab = slab.at[rb, HEAD_PAD:HEAD_PAD + out_dim].set(bls[0])
    return slab


if __name__ == "__main__":
    key = jax.random.PRNGKey(0)
    k_params, k_state, k_eps = jax.random.split(key, 3)

    batch, in_dim, out_dim = 8, 16, 4

    params = init_actor_params(k_params, in_dim, out_dim)
    param_slab = pack_actor_params(params)

    state = jax.random.normal(k_state, (batch, in_dim), jnp.float32)
    # Noise for the Normal(mu, std) sample (reparameterization trick).
    eps = jax.random.normal(k_eps, (batch, out_dim), jnp.float32)

    action, mu, std = actor_forward(state, param_slab, eps)
    jax.block_until_ready((action, mu, std))

    # Sanity checks against a pure-JAX reference of the ORIGINAL formulation.
    w1, b1, wmu, bmu, wls, bls = params
    x_ref = jnp.maximum(state @ w1 + b1, 0.0)
    mu_ref = jnp.tanh(x_ref @ wmu + bmu)
    std_ref = jnp.exp(jax.nn.softplus(x_ref @ wls + bls))
    action_ref = mu_ref + std_ref * eps

    assert jnp.allclose(mu, mu_ref, atol=1e-5), "mu mismatch"
    assert jnp.allclose(std, std_ref, atol=1e-5), "std mismatch"
    assert jnp.allclose(action, action_ref, atol=1e-5), "action mismatch"

    print("KERNEL_OK")
</pallas_src>

<mosaic_0001>
module attributes {stable_mosaic.version = 11 : i64} {
  func.func @actor_kernel(%arg0: memref<8x16xf32, #tpu.memory_space<vmem>>, %arg1: memref<160x256xf32, #tpu.memory_space<vmem>>, %arg2: memref<8x128xf32, #tpu.memory_space<vmem>>, %arg3: memref<8x384xf32, #tpu.memory_space<vmem>>) attributes {dimension_semantics = [], scalar_prefetch = 0 : i64, scratch_operands = 0 : i64, tpu.core_type = #tpu.core_type<tc>} {
    %c0 = arith.constant 0 : index
    %c0_0 = arith.constant 0 : index
    %0 = vector.load %arg1[%c0, %c0_0] : memref<160x256xf32, #tpu.memory_space<vmem>>, vector<16x128xf32>
    %c16 = arith.constant 16 : index
    %c0_1 = arith.constant 0 : index
    %1 = vector.load %arg1[%c16, %c0_1] : memref<160x256xf32, #tpu.memory_space<vmem>>, vector<1x128xf32>
    %c24 = arith.constant 24 : index
    %c0_2 = arith.constant 0 : index
    %2 = vector.load %arg1[%c24, %c0_2] : memref<160x256xf32, #tpu.memory_space<vmem>>, vector<128x256xf32>
    %c152 = arith.constant 152 : index
    %c0_3 = arith.constant 0 : index
    %3 = vector.load %arg1[%c152, %c0_3] : memref<160x256xf32, #tpu.memory_space<vmem>>, vector<1x256xf32>
    %c0_4 = arith.constant 0 : index
    %c0_5 = arith.constant 0 : index
    %4 = vector.load %arg0[%c0_4, %c0_5] : memref<8x16xf32, #tpu.memory_space<vmem>>, vector<8x16xf32>
    %cst = arith.constant dense<0.000000e+00> : vector<8x128xf32>
    %5 = tpu.matmul %4, %0, %cst {dimension_numbers = #tpu.dot_dimension_numbers<[1], [0], [0], [1], [0, 0, 1, 1], [], []>} : vector<8x16xf32>, vector<16x128xf32>, vector<8x128xf32> -> vector<8x128xf32>
    %6 = vector.broadcast %1 : vector<1x128xf32> to vector<8x128xf32>
    %7 = arith.addf %5, %6 : vector<8x128xf32>
    %cst_6 = arith.constant 0.000000e+00 : f32
    %8 = vector.broadcast %cst_6 : f32 to vector<8x128xf32>
    %9 = arith.maximumf %7, %8 : vector<8x128xf32>
    %cst_7 = arith.constant dense<0.000000e+00> : vector<8x256xf32>
    %10 = tpu.matmul %9, %2, %cst_7 {dimension_numbers = #tpu.dot_dimension_numbers<[1], [0], [0], [1], [0, 0, 1, 1], [], []>} : vector<8x128xf32>, vector<128x256xf32>, vector<8x256xf32> -> vector<8x256xf32>
    %11 = vector.broadcast %3 : vector<1x256xf32> to vector<8x256xf32>
    %12 = arith.addf %10, %11 : vector<8x256xf32>
    %13 = vector.extract_strided_slice %12 {offsets = [0, 0], sizes = [8, 128], strides = [1, 1]} : vector<8x256xf32> to vector<8x128xf32>
    %14 = math.tanh %13 : vector<8x128xf32>
    %15 = vector.extract_strided_slice %12 {offsets = [0, 128], sizes = [8, 128], strides = [1, 1]} : vector<8x256xf32> to vector<8x128xf32>
    %16 = math.exp %15 : vector<8x128xf32>
    %cst_8 = arith.constant 1.000000e+00 : f32
    %17 = vector.broadcast %cst_8 : f32 to vector<8x128xf32>
    %18 = arith.addf %17, %16 : vector<8x128xf32>
    %c0_9 = arith.constant 0 : index
    %c0_10 = arith.constant 0 : index
    %19 = vector.load %arg2[%c0_9, %c0_10] : memref<8x128xf32, #tpu.memory_space<vmem>>, vector<8x128xf32>
    %20 = arith.mulf %18, %19 : vector<8x128xf32>
    %21 = arith.addf %14, %20 : vector<8x128xf32>
    %c0_11 = arith.constant 0 : index
    %c0_12 = arith.constant 0 : index
    %22 = vector.load %arg3[%c0_11, %c0_12] : memref<8x384xf32, #tpu.memory_space<vmem>>, vector<8x128xf32>
    tpu.vector_store %arg3[%c0_11, %c0_12], %21 {strides = array<i32>} : memref<8x384xf32, #tpu.memory_space<vmem>>, vector<8x128xf32>,
    %c0_13 = arith.constant 0 : index
    %c128 = arith.constant 128 : index
    %23 = vector.load %arg3[%c0_13, %c128] : memref<8x384xf32, #tpu.memory_space<vmem>>, vector<8x128xf32>
    tpu.vector_store %arg3[%c0_13, %c128], %14 {strides = array<i32>} : memref<8x384xf32, #tpu.memory_space<vmem>>, vector<8x128xf32>,
    %c0_14 = arith.constant 0 : index
    %c256 = arith.constant 256 : index
    %24 = vector.load %arg3[%c0_14, %c256] : memref<8x384xf32, #tpu.memory_space<vmem>>, vector<8x128xf32>
    tpu.vector_store %arg3[%c0_14, %c256], %18 {strides = array<i32>} : memref<8x384xf32, #tpu.memory_space<vmem>>, vector<8x128xf32>,
    return
  }
}

</mosaic_0001>

<llo_original>
// kernel: tpu_custom_call.1
$region0: #{tpu_custom_call.1}
  #allocation0 [shape = 'u32[]', space=smem, size = 0x4, offset = 0x4, fixed_abs, tag = 'smem constant byte address 0x4 - core index']
  #allocation1 [shape = 'u32[72,128]{1,0:T(1,128)}', space=vmem, size = 0x9000, scoped, tag = 'internal scratch']
  %s0 = inlined_call_operand.hbm [shape: f32[8,16], index: 0, kind: input, shape index: {}]
  %s1 = inlined_call_operand.hbm [shape: f32[160,256], index: 1, kind: input, shape index: {}]
  %s2 = inlined_call_operand.hbm [shape: f32[8,128], index: 2, kind: input, shape index: {}]
  %s3 = inlined_call_operand.hbm [shape: f32[8,384], index: 3, kind: output, shape index: {}]
  %s4 = sld [smem:[#allocation0]]
  $region34: #{tpu_custom_call.1} parent=0
    _
  %s6 = ssub.s32 1, %s4
  %s7 = scalar_select 0, %s6, %s4
  $region1: #{tpu_custom_call.1} parent=0
    #allocation2 [shape = 'u8[4096]{0}', space=vmem, size = 0x1000, scoped, tag = 'input window, operand 0, single buffered']
    #allocation3 [shape = 's32[1]{0}', space=sflag, size = 0x4, scoped, tag = 'scoped memory for tpu_custom_call.1']
    #allocation4 [shape = 's32[1]{0}', space=sflag, size = 0x4, scoped, tag = 'scoped memory for tpu_custom_call.1']
    #allocation5 [shape = 'u8[163840]{0}', space=vmem, size = 0x28000, scoped, tag = 'input window, operand 1, single buffered']
    #allocation6 [shape = 's32[1]{0}', space=sflag, size = 0x4, scoped, tag = 'scoped memory for tpu_custom_call.1']
    #allocation7 [shape = 'u8[4096]{0}', space=vmem, size = 0x1000, scoped, tag = 'input window, operand 2, single buffered']
    #allocation8 [shape = 'u8[12288]{0}', space=vmem, size = 0x3000, scoped, tag = 'output window, operand 0, single buffered']
    %8 = vsyncpa [#allocation3], 0
    %9 = vsyncpa [#allocation6], 0
    %10 = vsyncpa [#allocation4], 0
    // Predicated region
    $region2: #{tpu_custom_call.1} parent=1 // pred_check
      _
    $region3: #{tpu_custom_call.1} parent=1 // pred_check_branch
      %12 = sbr.rel (0) target = $region5
    $region4: #{tpu_custom_call.1} parent=1 // pred_region
      %14 = vsyncadd [#allocation3], 0
      %s16 = sshll.u32 %s0, 4
      %s17 = int_to_ptr.hbm [resolvable:$true] %s16
      %s18 = sshll.u32 [#allocation2], 4
      %s19 = int_to_ptr.vmem [resolvable:$true] %s18
      %21 = dma.hbm_to_vmem [thread:$0]  %s17, 128, %s19, [#allocation3]
    $region5: #{tpu_custom_call.1} parent=1 // pred_fallthru
      _
    // Predicated region
    $region6: #{tpu_custom_call.1} parent=1 // pred_check
      _
    $region7: #{tpu_custom_call.1} parent=1 // pred_check_branch
      %23 = sbr.rel (0) target = $region9
    $region8: #{tpu_custom_call.1} parent=1 // pred_region
      %25 = vsyncadd [#allocation6], 0
      %s26 = sshll.u32 %s1, 4
      %s27 = int_to_ptr.hbm [resolvable:$true] %s26
      %s28 = sshll.u32 [#allocation5], 4
      %s29 = int_to_ptr.vmem [resolvable:$true] %s28
      %34 = dma.hbm_to_vmem [thread:$0]  %s27, 5120, %s29, [#allocation6], 256, 256, 16
    $region9: #{tpu_custom_call.1} parent=1 // pred_fallthru
      _
    // Predicated region
    $region10: #{tpu_custom_call.1} parent=1 // pred_check
      _
    $region11: #{tpu_custom_call.1} parent=1 // pred_check_branch
      %36 = sbr.rel (0) target = $region13
    $region12: #{tpu_custom_call.1} parent=1 // pred_region
      %38 = vsyncadd [#allocation6], 0
      %s40 = sshll.u32 %s2, 4
      %s41 = int_to_ptr.hbm [resolvable:$true] %s40
      %s42 = sshll.u32 [#allocation7], 4
      %s43 = int_to_ptr.vmem [resolvable:$true] %s42
      %45 = dma.hbm_to_vmem [thread:$0]  %s41, 128, %s43, [#allocation6]
    $region13: #{tpu_custom_call.1} parent=1 // pred_fallthru
      _
    // Predicated region
    $region14: #{tpu_custom_call.1} parent=1 // pred_check
      _
    $region15: #{tpu_custom_call.1} parent=1 // pred_check_branch
      %47 = sbr.rel (0) target = $region17
    $region16: #{tpu_custom_call.1} parent=1 // pred_region
      %49 = dma.done [#allocation3], 128
    $region17: #{tpu_custom_call.1} parent=1 // pred_fallthru
      _
    // Predicated region
    $region18: #{tpu_custom_call.1} parent=1 // pred_check
      _
    $region19: #{tpu_custom_call.1} parent=1 // pred_check_branch
      %51 = sbr.rel (0) target = $region21
    $region20: #{tpu_custom_call.1} parent=1 // pred_region
      %53 = dma.done [#allocation6], 5120
    $region21: #{tpu_custom_call.1} parent=1 // pred_fallthru
      _
    // Predicated region
    $region22: #{tpu_custom_call.1} parent=1 // pred_check
      _
    $region23: #{tpu_custom_call.1} parent=1 // pred_check_branch
      %55 = sbr.rel (0) target = $region25
    $region24: #{tpu_custom_call.1} parent=1 // pred_region
      %57 = dma.done [#allocation6], 128
    $region25: #{tpu_custom_call.1} parent=1 // pred_fallthru
      _
    %v58 = vld [vmem:[#allocation5] sm:$0xff]
    %v59 = vld [vmem:[#allocation5 + $0x10] sm:$0xff]
    %v60 = vld [vmem:[#allocation5 + $0x20] ss:$0 sm:$0xff]
    %v61 = vld [vmem:[#allocation5 + $0x30] sm:$0xff]
    %v62 = vld [vmem:[#allocation5 + $0x38] sm:$0xff]
    %v63 = vld [vmem:[#allocation5 + $0x40] sm:$0xff]
    %v64 = vld [vmem:[#allocation5 + $0x48] sm:$0xff]
    %v65 = vld [vmem:[#allocation5 + $0x50] sm:$0xff]
    %v66 = vld [vmem:[#allocation5 + $0x58] sm:$0xff]
    %v67 = vld [vmem:[#allocation5 + $0x60] sm:$0xff]
    %v68 = vld [vmem:[#allocation5 + $0x68] sm:$0xff]
    %v69 = vld [vmem:[#allocation5 + $0x70] sm:$0xff]
    %v70 = vld [vmem:[#allocation5 + $0x78] sm:$0xff]
    %v71 = vld [vmem:[#allocation5 + $0x80] sm:$0xff]
    %v72 = vld [vmem:[#allocation5 + $0x88] sm:$0xff]
    %v73 = vld [vmem:[#allocation5 + $0x90] sm:$0xff]
    %v74 = vld [vmem:[#allocation5 + $0x98] sm:$0xff]
    %v75 = vld [vmem:[#allocation5 + $0xa0] sm:$0xff]
    %v76 = vld [vmem:[#allocation5 + $0xa8] sm:$0xff]
    %v77 = vld [vmem:[#allocation5 + $0xb0] sm:$0xff]
    %v78 = vld [vmem:[#allocation5 + $0xb8] sm:$0xff]
    %v79 = vld [vmem:[#allocation5 + $0xc0] sm:$0xff]
    %v80 = vld [vmem:[#allocation5 + $0xc8] sm:$0xff]
    %v81 = vld [vmem:[#allocation5 + $0xd0] sm:$0xff]
    %v82 = vld [vmem:[#allocation5 + $0xd8] sm:$0xff]
    %v83 = vld [vmem:[#allocation5 + $0xe0] sm:$0xff]
    %v84 = vld [vmem:[#allocation5 + $0xe8] sm:$0xff]
    %v85 = vld [vmem:[#allocation5 + $0xf0] sm:$0xff]
    %v86 = vld [vmem:[#allocation5 + $0xf8] sm:$0xff]
    %v87 = vld [vmem:[#allocation5 + $0x100] sm:$0xff]
    %v88 = vld [vmem:[#allocation5 + $0x108] sm:$0xff]
    %v89 = vld [vmem:[#allocation5 + $0x110] sm:$0xff]
    %v90 = vld [vmem:[#allocation5 + $0x118] sm:$0xff]
    %v91 = vld [vmem:[#allocation5 + $0x120] sm:$0xff]
    %v92 = vld [vmem:[#allocation5 + $0x128] sm:$0xff]
    %s93 = scalar_lea.vmem [#allocation5], 304
    %v94 = vld [vmem:[%s93] ss:$8 sm:$0x3]
    %v95 = vld [vmem:[#allocation2] sm:$0xff]
    %vm96 = vcmask 130048
    %v98 = vsel %vm96, %v95, 0
    %100 = vmatpush.msra.mxu0 0.0
    %101 = vmatpush.msra.mxu0 0.0
    %102 = vmatpush.msra.mxu0 0.0
    %103 = vmatpush.msra.mxu0 0.0
    %104 = vmatpush.msra.mxu0 0.0
    %105 = vmatpush.msra.mxu0 0.0
    %106 = vmatpush.msra.mxu0 0.0
    %107 = vmatpush.msra.mxu0 0.0
    %108 = vmatpush.msra.mxu0 0.0
    %109 = vmatpush.msra.mxu0 0.0
    %110 = vmatpush.msra.mxu0 0.0
    %111 = vmatpush.msra.mxu0 0.0
    %112 = vmatpush.msra.mxu0 0.0
    %113 = vmatpush.msra.mxu0 0.0
    %114 = vmatpush.msra.mxu0 %v59
    %115 = vmatpush.msra.mxu0 %v58
    %116 = vmatmul.f32.gmra.mxu0 %v98
    %v117 = vpop.f32.mrf.mxu0
    %v118 = vadd.f32 %v60, %v117
    %119 = vdwg.mxu0
    %v120 = vmax.f32 %v118, 0.0
    %v122 = vperm.slane %v94, 0
    %v123 = vperm.slane %v94, 1
    %126 = vmatpush.msra.mxu0 %v91
    %127 = vmatpush.msra.mxu0 %v89
    %128 = vmatpush.msra.mxu0 %v87
    %129 = vmatpush.msra.mxu0 %v85
    %130 = vmatpush.msra.mxu0 %v83
    %131 = vmatpush.msra.mxu0 %v81
    %132 = vmatpush.msra.mxu0 %v79
    %133 = vmatpush.msra.mxu0 %v77
    %134 = vmatpush.msra.mxu0 %v75
    %135 = vmatpush.msra.mxu0 %v73
    %136 = vmatpush.msra.mxu0 %v71
    %137 = vmatpush.msra.mxu0 %v69
    %138 = vmatpush.msra.mxu0 %v67
    %139 = vmatpush.msra.mxu0 %v65
    %140 = vmatpush.msra.mxu0 %v63
    %141 = vmatpush.msra.mxu0 %v61
    %142 = vmatmul.f32.gmra.mxu0 %v120
    %v143 = vpop.f32.mrf.mxu0
    %v144 = vadd.f32 %v122, %v143
    %145 = vdwg.mxu0
    %146 = vmatpush.msra.mxu0 %v92
    %147 = vmatpush.msra.mxu0 %v90
    %148 = vmatpush.msra.mxu0 %v88
    %149 = vmatpush.msra.mxu0 %v86
    %150 = vmatpush.msra.mxu0 %v84
    %151 = vmatpush.msra.mxu0 %v82
    %152 = vmatpush.msra.mxu0 %v80
    %153 = vmatpush.msra.mxu0 %v78
    %154 = vmatpush.msra.mxu0 %v76
    %155 = vmatpush.msra.mxu0 %v74
    %156 = vmatpush.msra.mxu0 %v72
    %157 = vmatpush.msra.mxu0 %v70
    %158 = vmatpush.msra.mxu0 %v68
    %159 = vmatpush.msra.mxu0 %v66
    %160 = vmatpush.msra.mxu0 %v64
    %161 = vmatpush.msra.mxu0 %v62
    %162 = vmatmul.f32.gmra.mxu0 %v120
    %v163 = vpop.f32.mrf.mxu0
    %v164 = vadd.f32 %v123, %v163
    %165 = vdwg.mxu0
    %v166 = vtanh.pop %v144
    %v167 = vmul.f32 %v164, 1.442695
    %v168 = vpow.pop %v167
    %v169 = vadd.f32 %v168, 1.0
    %v170 = vld [vmem:[#allocation7] sm:$0xff]
    %v171 = vmul.f32 %v169, %v170
    %v172 = vadd.f32 %v166, %v171
    %173 = vst [vmem:[#allocation8] sm:$0xff] %v172
    %174 = vst [vmem:[#allocation8 + $0x8] sm:$0xff] %v166
    %175 = vst [vmem:[#allocation8 + $0x10] sm:$0xff] %v169
    // Predicated region
    $region26: #{tpu_custom_call.1} parent=1 // pred_check
      _
    $region27: #{tpu_custom_call.1} parent=1 // pred_check_branch
      %177 = sbr.rel (0) target = $region29
    $region28: #{tpu_custom_call.1} parent=1 // pred_region
      %179 = vsyncadd [#allocation4], 0
      %s181 = sshll.u32 [#allocation8], 4
      %s182 = int_to_ptr.vmem [resolvable:$true] %s181
      %s183 = sshll.u32 %s3, 4
      %s184 = int_to_ptr.hbm [resolvable:$true] %s183
      %186 = dma.vmem_to_hbm [thread:$0]  %s182, 384, %s184, [#allocation4]
    $region29: #{tpu_custom_call.1} parent=1 // pred_fallthru
      _
    // Predicated region
    $region30: #{tpu_custom_call.1} parent=1 // pred_check
      _
    $region31: #{tpu_custom_call.1} parent=1 // pred_check_branch
      %188 = sbr.rel (0) target = $region33
    $region32: #{tpu_custom_call.1} parent=1 // pred_region
      %190 = dma.done [#allocation4], 384
    $region33: #{tpu_custom_call.1} parent=1 // pred_fallthru
      _
    %191 = vsyncpa [#allocation3], 1
    %192 = vsyncpa [#allocation6], 1
    %193 = vsyncpa [#allocation4], 1

</llo_original>
